<compile_context>
chip_gen: v5e
topology: v5e:2x2
jax: 0.10.0
libtpu: 0.0.40
codegen_flags: <defaults>
</compile_context>

<pallas_src>
import jax
import jax.numpy as jnp
from jax.experimental import pallas as pl
from jax.experimental.pallas import tpu as pltpu


# ---------------------------------------------------------------------------
# Fused kernel: stacked one-hot gather -> single folded-W1 matmul -> ReLU ->
# Linear(80->72) -> ReLU -> Linear(72->1) (VPU+XLU).  Batch lives on lanes.
# ---------------------------------------------------------------------------
def recommender_kernel(
    xT_ref,    # (6, T) int32, segment-offset gather indices, batch on lanes
    f1_ref,    # (80, V) bf16  folded  W1_seg @ table_seg^T (segments concat on K)
    b1_ref,    # (80, 1) f32
    w2_ref,    # (72, 80) bf16
    b2_ref,    # (72, 1) f32
    w3c_ref,   # (72, 1) f32   W3 as a column (final layer on VPU + sublane reduce)
    b3_ref,    # (1,)    f32 in SMEM
    o_ref,     # (1, T)  f32 lane-dense scores
):
    f32 = jnp.float32
    bf16 = jnp.bfloat16

    xt = xT_ref[...]                          # (6, T) int32
    t = xt.shape[1]
    v = f1_ref.shape[1]

    # Stacked one-hot over the concatenated vocab: each batch column has
    # exactly 6 ones (the segments occupy disjoint row ranges).  0/1 are exact
    # in bf16, so the gather itself stays exact and both MXU operands are bf16.
    iota = jax.lax.broadcasted_iota(jnp.int32, (v, t), 0)
    hit = iota == xt[0:1, :]
    for r in range(1, 6):
        hit = hit | (iota == xt[r:r + 1, :])
    onehot = hit.astype(bf16)                 # (V, T) bf16

    # z1 = W1 @ hidden + b1 collapses into ONE matmul against the folded table.
    z1 = jnp.dot(f1_ref[...], onehot, preferred_element_type=f32) + b1_ref[...]
    z1 = jnp.maximum(z1, 0.0)                 # (80, T) f32  (Dropout = identity)

    # Linear(80->72) -> Dropout(identity) -> ReLU
    z2 = jnp.dot(w2_ref[...], z1.astype(bf16), preferred_element_type=f32) + b2_ref[...]
    z2 = jnp.maximum(z2, 0.0)                 # (72, T) f32

    # Linear(72->1): an M=1 MXU push is >99% padding, so do it as a VPU
    # multiply + cross-sublane (XLU) reduction in full f32.
    o_ref[...] = jnp.sum(w3c_ref[...] * z2, axis=0, keepdims=True) + b3_ref[0]


# ---------------------------------------------------------------------------
# One-time parameter prep (hoisted out of the per-call wrapper).
# ---------------------------------------------------------------------------
def prepare_params(params):
    f32 = jnp.float32
    ue = params["user_embedding"].astype(f32)         # (n_users, 64)
    ie = params["item_embedding"].astype(f32)         # (n_items, 64)
    um = params["user_meta_embedding"].astype(f32)    # (n_umeta, 8)
    im = params["item_meta_embedding"].astype(f32)    # (n_imeta, 8)

    d = ue.shape[1]
    m = um.shape[1]
    w1 = params["w1"].astype(f32)                     # (80, 160) torch (out, in)

    # Concat order of hidden in forward():
    #   [user_emb(x1) | umeta(x4) | umeta(x5) | item_emb(x0) | imeta(x2) | imeta(x3)]
    seg_tables = [ue, um, um, ie, im, im]
    seg_cols = [1, 4, 5, 0, 2, 3]                     # which x column feeds each segment
    splits = [0, d, d + m, d + 2 * m, 2 * d + 2 * m, 2 * d + 3 * m, 2 * d + 4 * m]

    blocks, bases, base = [], [], 0
    for k, tbl in enumerate(seg_tables):
        # Fold W1's column block into its embedding table: (80, vocab_k).
        blocks.append(w1[:, splits[k]:splits[k + 1]] @ tbl.T)
        bases.append(base)
        base += tbl.shape[0]

    return {
        # bf16 cast of the folded table introduces ~bf16-level deviation vs f32.
        "f1": jnp.concatenate(blocks, axis=1).astype(jnp.bfloat16),   # (80, V)
        "b1": params["b1"].reshape(-1, 1).astype(f32),                # (80, 1)
        "w2": params["w2"].astype(jnp.bfloat16),                      # (72, 80)
        "b2": params["b2"].reshape(-1, 1).astype(f32),                # (72, 1)
        "w3c": params["w3"].astype(f32).reshape(-1, 1),               # (72, 1)
        "b3": params["b3"].reshape(1).astype(f32),                    # (1,)
        "seg_cols": jnp.asarray(seg_cols, jnp.int32),                 # (6,)
        "seg_bases": jnp.asarray(bases, jnp.int32).reshape(6, 1),     # (6, 1)
    }


def _choose_tile(bsz):
    # Small batches: single step (block == full array, satisfies (8,128) rule).
    if bsz <= 256:
        return bsz
    # Otherwise: aim for >=2 lane-aligned grid steps (both TCs on v7x) with
    # 256-aligned tiles, capped at 2048 lanes (footprint stays << VMEM).
    tile = pl.cdiv(pl.cdiv(bsz, 2), 256) * 256
    return min(tile, 2048)


# ---------------------------------------------------------------------------
# Per-call wrapper: only the tiny (B,6) index permute/offset/transpose + call.
# ---------------------------------------------------------------------------
def recommender_forward(prepped, x):
    """x: (B, 6) int32 index rows.  Returns (B,) float32 scores."""
    bsz = x.shape[0]
    tile_b = _choose_tile(bsz)
    grid = (pl.cdiv(bsz, tile_b),)

    # Permute the 6 index columns into segment order and add each segment's
    # base offset into the concatenated vocab.  Batch ends up on lanes.
    xT = (jnp.take(x.astype(jnp.int32), prepped["seg_cols"], axis=1).T
          + prepped["seg_bases"])                                     # (6, B)

    def const2d(a):
        # Full-array block, same block every grid step -> stays VMEM-resident.
        return pl.BlockSpec(a.shape, lambda i: (0, 0))

    f1, b1, w2, b2, w3c, b3 = (prepped["f1"], prepped["b1"], prepped["w2"],
                               prepped["b2"], prepped["w3c"], prepped["b3"])

    out = pl.pallas_call(
        recommender_kernel,
        out_shape=jax.ShapeDtypeStruct((1, bsz), jnp.float32),
        grid=grid,
        in_specs=[
            pl.BlockSpec((6, tile_b), lambda i: (0, i)),        # indices, tiled on batch
            const2d(f1), const2d(b1), const2d(w2), const2d(b2), const2d(w3c),
            pl.BlockSpec(memory_space=pltpu.MemorySpace.SMEM),  # b3 scalar
        ],
        out_specs=pl.BlockSpec((1, tile_b), lambda i: (0, i)),  # lane-dense scores
        compiler_params=pltpu.CompilerParams(
            dimension_semantics=("parallel",)),
    )(xT, f1, b1, w2, b2, w3c, b3)

    return out[0]                             # (B,)


# ---------------------------------------------------------------------------
# Parameter construction (deterministic, synthetic).  Head weights stored in
# torch Linear layout (out_features, in_features); W1/W2 as bf16 for the MXU.
# ---------------------------------------------------------------------------
def init_params(key, n_users, n_items, n_umeta, n_imeta,
                hidden_dim=64, hidden_meta_dim=8):
    d_in = hidden_dim * 2 + hidden_meta_dim * 2 * 2             # 160
    d_h1 = hidden_dim + hidden_meta_dim * 2                     # 80
    d_h2 = hidden_dim + hidden_meta_dim * 2 // 2                # 72 (torch precedence)

    ks = jax.random.split(key, 10)
    s = 0.05
    bf16 = jnp.bfloat16
    return {
        "user_embedding": s * jax.random.normal(ks[0], (n_users, hidden_dim), jnp.float32),
        "item_embedding": s * jax.random.normal(ks[1], (n_items, hidden_dim), jnp.float32),
        "user_meta_embedding": s * jax.random.normal(ks[2], (n_umeta, hidden_meta_dim), jnp.float32),
        "item_meta_embedding": s * jax.random.normal(ks[3], (n_imeta, hidden_meta_dim), jnp.float32),
        # present in __init__ but unused by forward()
        "user_bias": jnp.zeros((n_users, 1), jnp.float32),
        "item_bias": jnp.zeros((n_items, 1), jnp.float32),
        "global_bias": jnp.zeros((1,), jnp.float32),
        # head (torch (out, in) layout; bf16 weights, f32 biases)
        "w1": (s * jax.random.normal(ks[4], (d_h1, d_in), jnp.float32)).astype(bf16),
        "b1": s * jax.random.normal(ks[5], (d_h1,), jnp.float32),
        "w2": (s * jax.random.normal(ks[6], (d_h2, d_h1), jnp.float32)).astype(bf16),
        "b2": s * jax.random.normal(ks[7], (d_h2,), jnp.float32),
        "w3": (s * jax.random.normal(ks[8], (1, d_h2), jnp.float32)).astype(bf16),
        "b3": s * jax.random.normal(ks[9], (1,), jnp.float32),
    }


# ---------------------------------------------------------------------------
# Plain-JAX f32 reference of the module's forward (for correctness checking).
# ---------------------------------------------------------------------------
def reference_forward(params, x):
    bsz = x.shape[0]
    ue = params["user_embedding"][x[:, 1]]
    ie = params["item_embedding"][x[:, 0]]
    ume = params["user_meta_embedding"][x[:, 4:6]].reshape(bsz, -1)
    ime = params["item_meta_embedding"][x[:, 2:4]].reshape(bsz, -1)
    hidden = jnp.concatenate([ue, ume, ie, ime], axis=1)        # (B, 160)
    w1 = params["w1"].astype(jnp.float32)
    w2 = params["w2"].astype(jnp.float32)
    w3 = params["w3"].astype(jnp.float32)
    z1 = jnp.maximum(hidden @ w1.T + params["b1"], 0.0)
    z2 = jnp.maximum(z1 @ w2.T + params["b2"], 0.0)
    return (z2 @ w3.T + params["b3"])[:, 0]


if __name__ == "__main__":
    n_users, n_items, n_umeta, n_imeta = 50, 40, 10, 12
    hidden_dim, hidden_meta_dim = 64, 8
    bsz = 8

    key = jax.random.PRNGKey(0)
    pkey, k_item, k_user, k_imeta, k_umeta = jax.random.split(key, 5)
    params = init_params(pkey, n_users, n_items, n_umeta, n_imeta,
                         hidden_dim, hidden_meta_dim)

    x = jnp.concatenate(
        [
            jax.random.randint(k_item, (bsz, 1), 0, n_items, jnp.int32),
            jax.random.randint(k_user, (bsz, 1), 0, n_users, jnp.int32),
            jax.random.randint(k_imeta, (bsz, 2), 0, n_imeta, jnp.int32),
            jax.random.randint(k_umeta, (bsz, 2), 0, n_umeta, jnp.int32),
        ],
        axis=1,
    )  # (B, 6) int32

    prepped = prepare_params(params)          # one-time fold / cast / transpose
    fwd = jax.jit(recommender_forward)
    out = jax.block_until_ready(fwd(prepped, x))
    ref = jax.block_until_ready(reference_forward(params, x))

    assert out.shape == (bsz,)
    # bf16 MXU operands + bf16 folded W1-tables (f32 accumulate) -> bf16-level
    # tolerance vs. the f32 reference.
    assert jnp.allclose(out, ref, atol=5e-3, rtol=5e-3), (out, ref)
    print("KERNEL_OK")
</pallas_src>

<mosaic_0001>
module attributes {stable_mosaic.version = 11 : i64} {
  func.func @recommender_kernel(%arg0: i32, %arg1: memref<6x8xi32, #tpu.memory_space<vmem>>, %arg2: memref<80x134xbf16, #tpu.memory_space<vmem>>, %arg3: memref<80x1xf32, #tpu.memory_space<vmem>>, %arg4: memref<72x80xbf16, #tpu.memory_space<vmem>>, %arg5: memref<72x1xf32, #tpu.memory_space<vmem>>, %arg6: memref<72x1xf32, #tpu.memory_space<vmem>>, %arg7: memref<1xf32, #tpu.memory_space<smem>>, %arg8: memref<1x8xf32, #tpu.memory_space<vmem>>) attributes {dimension_semantics = [#tpu.dimension_semantics<parallel>], iteration_bounds = array<i64: 1>, scalar_prefetch = 0 : i64, scratch_operands = 0 : i64, tpu.core_type = #tpu.core_type<tc>, window_params = [{transform_indices = @transform_0, window_bounds = array<i64: 6, 8>}, {pipeline_mode = #tpu.pipeline_mode<synchronous>, transform_indices = @transform_1, window_bounds = array<i64: 80, 134>}, {pipeline_mode = #tpu.pipeline_mode<synchronous>, transform_indices = @transform_2, window_bounds = array<i64: 80, 1>}, {pipeline_mode = #tpu.pipeline_mode<synchronous>, transform_indices = @transform_3, window_bounds = array<i64: 72, 80>}, {pipeline_mode = #tpu.pipeline_mode<synchronous>, transform_indices = @transform_4, window_bounds = array<i64: 72, 1>}, {pipeline_mode = #tpu.pipeline_mode<synchronous>, transform_indices = @transform_5, window_bounds = array<i64: 72, 1>}, {transform_indices = @transform_6, window_bounds = array<i64: 1>}, {transform_indices = @transform_7, window_bounds = array<i64: 1, 8>}]} {
    %c0 = arith.constant 0 : index
    %c0_0 = arith.constant 0 : index
    %0 = vector.load %arg1[%c0, %c0_0] : memref<6x8xi32, #tpu.memory_space<vmem>>, vector<6x8xi32>
    %1 = tpu.iota {dimensions = array<i32: 0>} : vector<134x8xi32>
    %2 = vector.extract_strided_slice %0 {offsets = [0, 0], sizes = [1, 8], strides = [1, 1]} : vector<6x8xi32> to vector<1x8xi32>
    %3 = vector.broadcast %2 : vector<1x8xi32> to vector<134x8xi32>
    %4 = arith.cmpi eq, %1, %3 : vector<134x8xi32>
    %5 = vector.extract_strided_slice %0 {offsets = [1, 0], sizes = [1, 8], strides = [1, 1]} : vector<6x8xi32> to vector<1x8xi32>
    %6 = vector.broadcast %5 : vector<1x8xi32> to vector<134x8xi32>
    %7 = arith.cmpi eq, %1, %6 : vector<134x8xi32>
    %8 = arith.ori %4, %7 : vector<134x8xi1>
    %9 = vector.extract_strided_slice %0 {offsets = [2, 0], sizes = [1, 8], strides = [1, 1]} : vector<6x8xi32> to vector<1x8xi32>
    %10 = vector.broadcast %9 : vector<1x8xi32> to vector<134x8xi32>
    %11 = arith.cmpi eq, %1, %10 : vector<134x8xi32>
    %12 = arith.ori %8, %11 : vector<134x8xi1>
    %13 = vector.extract_strided_slice %0 {offsets = [3, 0], sizes = [1, 8], strides = [1, 1]} : vector<6x8xi32> to vector<1x8xi32>
    %14 = vector.broadcast %13 : vector<1x8xi32> to vector<134x8xi32>
    %15 = arith.cmpi eq, %1, %14 : vector<134x8xi32>
    %16 = arith.ori %12, %15 : vector<134x8xi1>
    %17 = vector.extract_strided_slice %0 {offsets = [4, 0], sizes = [1, 8], strides = [1, 1]} : vector<6x8xi32> to vector<1x8xi32>
    %18 = vector.broadcast %17 : vector<1x8xi32> to vector<134x8xi32>
    %19 = arith.cmpi eq, %1, %18 : vector<134x8xi32>
    %20 = arith.ori %16, %19 : vector<134x8xi1>
    %21 = vector.extract_strided_slice %0 {offsets = [5, 0], sizes = [1, 8], strides = [1, 1]} : vector<6x8xi32> to vector<1x8xi32>
    %22 = vector.broadcast %21 : vector<1x8xi32> to vector<134x8xi32>
    %23 = arith.cmpi eq, %1, %22 : vector<134x8xi32>
    %24 = arith.ori %20, %23 : vector<134x8xi1>
    %25 = arith.extui %24 : vector<134x8xi1> to vector<134x8xi32>
    %26 = arith.sitofp %25 : vector<134x8xi32> to vector<134x8xf32>
    %27 = arith.truncf %26 : vector<134x8xf32> to vector<134x8xbf16>
    %c0_1 = arith.constant 0 : index
    %c0_2 = arith.constant 0 : index
    %28 = vector.load %arg2[%c0_1, %c0_2] : memref<80x134xbf16, #tpu.memory_space<vmem>>, vector<80x134xbf16>
    %cst = arith.constant dense<0.000000e+00> : vector<80x8xf32>
    %29 = tpu.matmul %28, %27, %cst {dimension_numbers = #tpu.dot_dimension_numbers<[1], [0], [0], [1], [0, 0, 1, 1], [], []>} : vector<80x134xbf16>, vector<134x8xbf16>, vector<80x8xf32> -> vector<80x8xf32>
    %c0_3 = arith.constant 0 : index
    %c0_4 = arith.constant 0 : index
    %30 = vector.load %arg3[%c0_3, %c0_4] : memref<80x1xf32, #tpu.memory_space<vmem>>, vector<80x1xf32>
    %31 = vector.broadcast %30 : vector<80x1xf32> to vector<80x8xf32>
    %32 = arith.addf %29, %31 : vector<80x8xf32>
    %cst_5 = arith.constant 0.000000e+00 : f32
    %33 = vector.broadcast %cst_5 : f32 to vector<80x8xf32>
    %34 = arith.maximumf %32, %33 : vector<80x8xf32>
    %c0_6 = arith.constant 0 : index
    %c0_7 = arith.constant 0 : index
    %35 = vector.load %arg4[%c0_6, %c0_7] : memref<72x80xbf16, #tpu.memory_space<vmem>>, vector<72x80xbf16>
    %36 = arith.truncf %34 : vector<80x8xf32> to vector<80x8xbf16>
    %cst_8 = arith.constant dense<0.000000e+00> : vector<72x8xf32>
    %37 = tpu.matmul %35, %36, %cst_8 {dimension_numbers = #tpu.dot_dimension_numbers<[1], [0], [0], [1], [0, 0, 1, 1], [], []>} : vector<72x80xbf16>, vector<80x8xbf16>, vector<72x8xf32> -> vector<72x8xf32>
    %c0_9 = arith.constant 0 : index
    %c0_10 = arith.constant 0 : index
    %38 = vector.load %arg5[%c0_9, %c0_10] : memref<72x1xf32, #tpu.memory_space<vmem>>, vector<72x1xf32>
    %39 = vector.broadcast %38 : vector<72x1xf32> to vector<72x8xf32>
    %40 = arith.addf %37, %39 : vector<72x8xf32>
    %cst_11 = arith.constant 0.000000e+00 : f32
    %41 = vector.broadcast %cst_11 : f32 to vector<72x8xf32>
    %42 = arith.maximumf %40, %41 : vector<72x8xf32>
    %c0_12 = arith.constant 0 : index
    %c0_13 = arith.constant 0 : index
    %43 = vector.load %arg6[%c0_12, %c0_13] : memref<72x1xf32, #tpu.memory_space<vmem>>, vector<72x1xf32>
    %44 = vector.broadcast %43 : vector<72x1xf32> to vector<72x8xf32>
    %45 = arith.mulf %44, %42 : vector<72x8xf32>
    %cst_14 = arith.constant dense<0.000000e+00> : vector<8xf32>
    %46 = vector.multi_reduction <add>, %45, %cst_14 [0] : vector<72x8xf32> to vector<8xf32>
    %47 = vector.shape_cast %46 : vector<8xf32> to vector<1x8xf32>
    %c0_15 = arith.constant 0 : index
    %48 = memref.load %arg7[%c0_15] : memref<1xf32, #tpu.memory_space<smem>>
    %49 = vector.broadcast %48 : f32 to vector<1x8xf32>
    %50 = arith.addf %47, %49 : vector<1x8xf32>
    %c0_16 = arith.constant 0 : index
    %c0_17 = arith.constant 0 : index
    %51 = vector.load %arg8[%c0_16, %c0_17] : memref<1x8xf32, #tpu.memory_space<vmem>>, vector<1x8xf32>
    tpu.vector_store %arg8[%c0_16, %c0_17], %50 {strides = array<i32>} : memref<1x8xf32, #tpu.memory_space<vmem>>, vector<1x8xf32>,
    return
  }
  func.func @transform_0(%arg0: i32) -> (i32, i32) {
    %c0_i32 = arith.constant 0 : i32
    %c0_i32_0 = arith.constant 0 : i32
    return %c0_i32, %arg0 : i32, i32
  }
  func.func @transform_1(%arg0: i32) -> (i32, i32) {
    %c0_i32 = arith.constant 0 : i32
    %c0_i32_0 = arith.constant 0 : i32
    %c0_i32_1 = arith.constant 0 : i32
    return %c0_i32, %c0_i32_0 : i32, i32
  }
  func.func @transform_2(%arg0: i32) -> (i32, i32) {
    %c0_i32 = arith.constant 0 : i32
    %c0_i32_0 = arith.constant 0 : i32
    %c0_i32_1 = arith.constant 0 : i32
    return %c0_i32, %c0_i32_0 : i32, i32
  }
  func.func @transform_3(%arg0: i32) -> (i32, i32) {
    %c0_i32 = arith.constant 0 : i32
    %c0_i32_0 = arith.constant 0 : i32
    %c0_i32_1 = arith.constant 0 : i32
    return %c0_i32, %c0_i32_0 : i32, i32
  }
  func.func @transform_4(%arg0: i32) -> (i32, i32) {
    %c0_i32 = arith.constant 0 : i32
    %c0_i32_0 = arith.constant 0 : i32
    %c0_i32_1 = arith.constant 0 : i32
    return %c0_i32, %c0_i32_0 : i32, i32
  }
  func.func @transform_5(%arg0: i32) -> (i32, i32) {
    %c0_i32 = arith.constant 0 : i32
    %c0_i32_0 = arith.constant 0 : i32
    %c0_i32_1 = arith.constant 0 : i32
    return %c0_i32, %c0_i32_0 : i32, i32
  }
  func.func @transform_6(%arg0: i32) -> i32 {
    %c0_i32 = arith.constant 0 : i32
    %c0_i32_0 = arith.constant 0 : i32
    return %c0_i32 : i32
  }
  func.func @transform_7(%arg0: i32) -> (i32, i32) {
    %c0_i32 = arith.constant 0 : i32
    %c0_i32_0 = arith.constant 0 : i32
    return %c0_i32, %arg0 : i32, i32
  }
}

</mosaic_0001>

<llo_original>
// kernel: recommender_forward.1
$region0: #{recommender_forward.1}
  #allocation0 [shape = 'u32[]', space=smem, size = 0x4, offset = 0x4, fixed_abs, tag = 'smem constant byte address 0x4 - core index']
  #allocation1 [shape = 'u32[72,128]{1,0:T(1,128)}', space=vmem, size = 0x9000, scoped, tag = 'internal scratch']
  #allocation2 [shape = 'f32[1]{0:T(128)S(6)}', space=smem, size = 0x200, scoped, tag = 'scoped memory for recommender_forward.1']
  %s0 = inlined_call_operand.vmem [shape: s32[6,8], index: 0, kind: input, shape index: {}]
  %s1 = inlined_call_operand.vmem [shape: bf16[80,134], index: 1, kind: input, shape index: {}]
  %s2 = inlined_call_operand.vmem [shape: f32[80,1], index: 2, kind: input, shape index: {}]
  %s3 = inlined_call_operand.vmem [shape: bf16[72,80], index: 3, kind: input, shape index: {}]
  %s4 = inlined_call_operand.vmem [shape: f32[72,1], index: 4, kind: input, shape index: {}]
  %s5 = inlined_call_operand.vmem [shape: f32[72,1], index: 5, kind: input, shape index: {}]
  %s6 = inlined_call_operand.<no memory space> [shape: f32[1], index: 6, kind: input, shape index: {}]
  %s7 = inlined_call_operand.hbm [shape: f32[1,8], index: 7, kind: output, shape index: {}]
  %s8 = sld [smem:[#allocation0]]
  $region38: #{recommender_forward.1} parent=0
    _
  %s10 = ssub.s32 1, %s8
  %s11 = scalar_select 0, %s10, %s8
  %12 = sst [smem:[#allocation2]] %s6
  $region1: #{recommender_forward.1} parent=0
    #allocation3 [shape = 'u8[512]{0}', space=vmem, size = 0x400, scoped, tag = 'output window, operand 0, single buffered']
    #allocation4 [shape = 's32[1]{0}', space=sflag, size = 0x4, scoped, tag = 'scoped memory for recommender_forward.1']
    %13 = vsyncpa [#allocation4], 0
    // Predicated region
    $region2: #{recommender_forward.1} parent=1 // pred_check
      _
    $region3: #{recommender_forward.1} parent=1 // pred_check_branch
      %15 = sbr.rel (0) target = $region5
    $region4: #{recommender_forward.1} parent=1 // pred_region
      _
    $region5: #{recommender_forward.1} parent=1 // pred_fallthru
      _
    // Predicated region
    $region6: #{recommender_forward.1} parent=1 // pred_check
      _
    $region7: #{recommender_forward.1} parent=1 // pred_check_branch
      %17 = sbr.rel (0) target = $region9
    $region8: #{recommender_forward.1} parent=1 // pred_region
      _
    $region9: #{recommender_forward.1} parent=1 // pred_fallthru
      _
    // Predicated region
    $region10: #{recommender_forward.1} parent=1 // pred_check
      _
    $region11: #{recommender_forward.1} parent=1 // pred_check_branch
      %19 = sbr.rel (0) target = $region13
    $region12: #{recommender_forward.1} parent=1 // pred_region
      _
    $region13: #{recommender_forward.1} parent=1 // pred_fallthru
      _
    // Predicated region
    $region14: #{recommender_forward.1} parent=1 // pred_check
      _
    $region15: #{recommender_forward.1} parent=1 // pred_check_branch
      %21 = sbr.rel (0) target = $region17
    $region16: #{recommender_forward.1} parent=1 // pred_region
      _
    $region17: #{recommender_forward.1} parent=1 // pred_fallthru
      _
    // Predicated region
    $region18: #{recommender_forward.1} parent=1 // pred_check
      _
    $region19: #{recommender_forward.1} parent=1 // pred_check_branch
      %23 = sbr.rel (0) target = $region21
    $region20: #{recommender_forward.1} parent=1 // pred_region
      _
    $region21: #{recommender_forward.1} parent=1 // pred_fallthru
      _
    // Predicated region
    $region22: #{recommender_forward.1} parent=1 // pred_check
      _
    $region23: #{recommender_forward.1} parent=1 // pred_check_branch
      %25 = sbr.rel (0) target = $region25
    $region24: #{recommender_forward.1} parent=1 // pred_region
      _
    $region25: #{recommender_forward.1} parent=1 // pred_fallthru
      _
    // Predicated region
    $region26: #{recommender_forward.1} parent=1 // pred_check
      _
    $region27: #{recommender_forward.1} parent=1 // pred_check_branch
      %27 = sbr.rel (0) target = $region29
    $region28: #{recommender_forward.1} parent=1 // pred_region
      _
    $region29: #{recommender_forward.1} parent=1 // pred_fallthru
      _
    %v29 = vld [vmem:[%s0] sm:$0x3f]
    %v30 = vlaneseq
    %v31 = vshrl.u32 %v30, 7
    %v32 = vadd.s32 %v31, 8
    %v33 = vadd.s32 %v31, 16
    %v34 = vadd.s32 %v31, 24
    %v35 = vadd.s32 %v31, 32
    %v36 = vadd.s32 %v31, 40
    %v37 = vadd.s32 %v31, 48
    %v38 = vadd.s32 %v31, 56
    %v39 = vadd.s32 %v31, 64
    %v40 = vadd.s32 %v31, 72
    %v41 = vadd.s32 %v31, 80
    %v42 = vadd.s32 %v31, 88
    %v43 = vadd.s32 %v31, 96
    %v44 = vadd.s32 %v31, 104
    %v45 = vadd.s32 %v31, 112
    %v46 = vadd.s32 %v31, 120
    %v47 = vadd.s32 %v31, 128
    %v48 = vperm.slane %v29, 0
    %vm49 = vcmp.eq.s32.totalorder %v31, %v48
    %vm50 = vcmp.eq.s32.totalorder %v32, %v48
    %vm51 = vcmp.eq.s32.totalorder %v33, %v48
    %vm52 = vcmp.eq.s32.totalorder %v34, %v48
    %vm53 = vcmp.eq.s32.totalorder %v35, %v48
    %vm54 = vcmp.eq.s32.totalorder %v36, %v48
    %vm55 = vcmp.eq.s32.totalorder %v37, %v48
    %vm56 = vcmp.eq.s32.totalorder %v38, %v48
    %vm57 = vcmp.eq.s32.totalorder %v39, %v48
    %vm58 = vcmp.eq.s32.totalorder %v40, %v48
    %vm59 = vcmp.eq.s32.totalorder %v41, %v48
    %vm60 = vcmp.eq.s32.totalorder %v42, %v48
    %vm61 = vcmp.eq.s32.totalorder %v43, %v48
    %vm62 = vcmp.eq.s32.totalorder %v44, %v48
    %vm63 = vcmp.eq.s32.totalorder %v45, %v48
    %vm64 = vcmp.eq.s32.totalorder %v46, %v48
    %vm65 = vcmp.eq.s32.totalorder %v47, %v48
    %v66 = vperm.slane %v29, 1
    %vm67 = vcmp.eq.s32.totalorder %v31, %v66
    %vm68 = vcmp.eq.s32.totalorder %v32, %v66
    %vm69 = vcmp.eq.s32.totalorder %v33, %v66
    %vm70 = vcmp.eq.s32.totalorder %v34, %v66
    %vm71 = vcmp.eq.s32.totalorder %v35, %v66
    %vm72 = vcmp.eq.s32.totalorder %v36, %v66
    %vm73 = vcmp.eq.s32.totalorder %v37, %v66
    %vm74 = vcmp.eq.s32.totalorder %v38, %v66
    %vm75 = vcmp.eq.s32.totalorder %v39, %v66
    %vm76 = vcmp.eq.s32.totalorder %v40, %v66
    %vm77 = vcmp.eq.s32.totalorder %v41, %v66
    %vm78 = vcmp.eq.s32.totalorder %v42, %v66
    %vm79 = vcmp.eq.s32.totalorder %v43, %v66
    %vm80 = vcmp.eq.s32.totalorder %v44, %v66
    %vm81 = vcmp.eq.s32.totalorder %v45, %v66
    %vm82 = vcmp.eq.s32.totalorder %v46, %v66
    %vm83 = vcmp.eq.s32.totalorder %v47, %v66
    %vm84 = vmor %vm49, %vm67
    %vm85 = vmor %vm50, %vm68
    %vm86 = vmor %vm51, %vm69
    %vm87 = vmor %vm52, %vm70
    %vm88 = vmor %vm53, %vm71
    %vm89 = vmor %vm54, %vm72
    %vm90 = vmor %vm55, %vm73
    %vm91 = vmor %vm56, %vm74
    %vm92 = vmor %vm57, %vm75
    %vm93 = vmor %vm58, %vm76
    %vm94 = vmor %vm59, %vm77
    %vm95 = vmor %vm60, %vm78
    %vm96 = vmor %vm61, %vm79
    %vm97 = vmor %vm62, %vm80
    %vm98 = vmor %vm63, %vm81
    %vm99 = vmor %vm64, %vm82
    %vm100 = vmor %vm65, %vm83
    %v101 = vperm.slane %v29, 2
    %vm102 = vcmp.eq.s32.totalorder %v31, %v101
    %vm103 = vcmp.eq.s32.totalorder %v32, %v101
    %vm104 = vcmp.eq.s32.totalorder %v33, %v101
    %vm105 = vcmp.eq.s32.totalorder %v34, %v101
    %vm106 = vcmp.eq.s32.totalorder %v35, %v101
    %vm107 = vcmp.eq.s32.totalorder %v36, %v101
    %vm108 = vcmp.eq.s32.totalorder %v37, %v101
    %vm109 = vcmp.eq.s32.totalorder %v38, %v101
    %vm110 = vcmp.eq.s32.totalorder %v39, %v101
    %vm111 = vcmp.eq.s32.totalorder %v40, %v101
    %vm112 = vcmp.eq.s32.totalorder %v41, %v101
    %vm113 = vcmp.eq.s32.totalorder %v42, %v101
    %vm114 = vcmp.eq.s32.totalorder %v43, %v101
    %vm115 = vcmp.eq.s32.totalorder %v44, %v101
    %vm116 = vcmp.eq.s32.totalorder %v45, %v101
    %vm117 = vcmp.eq.s32.totalorder %v46, %v101
    %vm118 = vcmp.eq.s32.totalorder %v47, %v101
    %vm119 = vmor %vm84, %vm102
    %vm120 = vmor %vm85, %vm103
    %vm121 = vmor %vm86, %vm104
    %vm122 = vmor %vm87, %vm105
    %vm123 = vmor %vm88, %vm106
    %vm124 = vmor %vm89, %vm107
    %vm125 = vmor %vm90, %vm108
    %vm126 = vmor %vm91, %vm109
    %vm127 = vmor %vm92, %vm110
    %vm128 = vmor %vm93, %vm111
    %vm129 = vmor %vm94, %vm112
    %vm130 = vmor %vm95, %vm113
    %vm131 = vmor %vm96, %vm114
    %vm132 = vmor %vm97, %vm115
    %vm133 = vmor %vm98, %vm116
    %vm134 = vmor %vm99, %vm117
    %vm135 = vmor %vm100, %vm118
    %v136 = vperm.slane %v29, 3
    %vm137 = vcmp.eq.s32.totalorder %v31, %v136
    %vm138 = vcmp.eq.s32.totalorder %v32, %v136
    %vm139 = vcmp.eq.s32.totalorder %v33, %v136
    %vm140 = vcmp.eq.s32.totalorder %v34, %v136
    %vm141 = vcmp.eq.s32.totalorder %v35, %v136
    %vm142 = vcmp.eq.s32.totalorder %v36, %v136
    %vm143 = vcmp.eq.s32.totalorder %v37, %v136
    %vm144 = vcmp.eq.s32.totalorder %v38, %v136
    %vm145 = vcmp.eq.s32.totalorder %v39, %v136
    %vm146 = vcmp.eq.s32.totalorder %v40, %v136
    %vm147 = vcmp.eq.s32.totalorder %v41, %v136
    %vm148 = vcmp.eq.s32.totalorder %v42, %v136
    %vm149 = vcmp.eq.s32.totalorder %v43, %v136
    %vm150 = vcmp.eq.s32.totalorder %v44, %v136
    %vm151 = vcmp.eq.s32.totalorder %v45, %v136
    %vm152 = vcmp.eq.s32.totalorder %v46, %v136
    %vm153 = vcmp.eq.s32.totalorder %v47, %v136
    %vm154 = vmor %vm119, %vm137
    %vm155 = vmor %vm120, %vm138
    %vm156 = vmor %vm121, %vm139
    %vm157 = vmor %vm122, %vm140
    %vm158 = vmor %vm123, %vm141
    %vm159 = vmor %vm124, %vm142
    %vm160 = vmor %vm125, %vm143
    %vm161 = vmor %vm126, %vm144
    %vm162 = vmor %vm127, %vm145
    %vm163 = vmor %vm128, %vm146
    %vm164 = vmor %vm129, %vm147
    %vm165 = vmor %vm130, %vm148
    %vm166 = vmor %vm131, %vm149
    %vm167 = vmor %vm132, %vm150
    %vm168 = vmor %vm133, %vm151
    %vm169 = vmor %vm134, %vm152
    %vm170 = vmor %vm135, %vm153
    %v171 = vperm.slane %v29, 4
    %vm172 = vcmp.eq.s32.totalorder %v31, %v171
    %vm173 = vcmp.eq.s32.totalorder %v32, %v171
    %vm174 = vcmp.eq.s32.totalorder %v33, %v171
    %vm175 = vcmp.eq.s32.totalorder %v34, %v171
    %vm176 = vcmp.eq.s32.totalorder %v35, %v171
    %vm177 = vcmp.eq.s32.totalorder %v36, %v171
    %vm178 = vcmp.eq.s32.totalorder %v37, %v171
    %vm179 = vcmp.eq.s32.totalorder %v38, %v171
    %vm180 = vcmp.eq.s32.totalorder %v39, %v171
    %vm181 = vcmp.eq.s32.totalorder %v40, %v171
    %vm182 = vcmp.eq.s32.totalorder %v41, %v171
    %vm183 = vcmp.eq.s32.totalorder %v42, %v171
    %vm184 = vcmp.eq.s32.totalorder %v43, %v171
    %vm185 = vcmp.eq.s32.totalorder %v44, %v171
    %vm186 = vcmp.eq.s32.totalorder %v45, %v171
    %vm187 = vcmp.eq.s32.totalorder %v46, %v171
    %vm188 = vcmp.eq.s32.totalorder %v47, %v171
    %vm189 = vmor %vm154, %vm172
    %vm190 = vmor %vm155, %vm173
    %vm191 = vmor %vm156, %vm174
    %vm192 = vmor %vm157, %vm175
    %vm193 = vmor %vm158, %vm176
    %vm194 = vmor %vm159, %vm177
    %vm195 = vmor %vm160, %vm178
    %vm196 = vmor %vm161, %vm179
    %vm197 = vmor %vm162, %vm180
    %vm198 = vmor %vm163, %vm181
    %vm199 = vmor %vm164, %vm182
    %vm200 = vmor %vm165, %vm183
    %vm201 = vmor %vm166, %vm184
    %vm202 = vmor %vm167, %vm185
    %vm203 = vmor %vm168, %vm186
    %vm204 = vmor %vm169, %vm187
    %vm205 = vmor %vm170, %vm188
    %v206 = vperm.slane %v29, 5
    %vm207 = vcmp.eq.s32.totalorder %v31, %v206
    %vm208 = vcmp.eq.s32.totalorder %v32, %v206
    %vm209 = vcmp.eq.s32.totalorder %v33, %v206
    %vm210 = vcmp.eq.s32.totalorder %v34, %v206
    %vm211 = vcmp.eq.s32.totalorder %v35, %v206
    %vm212 = vcmp.eq.s32.totalorder %v36, %v206
    %vm213 = vcmp.eq.s32.totalorder %v37, %v206
    %vm214 = vcmp.eq.s32.totalorder %v38, %v206
    %vm215 = vcmp.eq.s32.totalorder %v39, %v206
    %vm216 = vcmp.eq.s32.totalorder %v40, %v206
    %vm217 = vcmp.eq.s32.totalorder %v41, %v206
    %vm218 = vcmp.eq.s32.totalorder %v42, %v206
    %vm219 = vcmp.eq.s32.totalorder %v43, %v206
    %vm220 = vcmp.eq.s32.totalorder %v44, %v206
    %vm221 = vcmp.eq.s32.totalorder %v45, %v206
    %vm222 = vcmp.eq.s32.totalorder %v46, %v206
    %vm223 = vcmp.eq.s32.totalorder %v47, %v206
    %vm224 = vmor %vm189, %vm207
    %vm225 = vmor %vm190, %vm208
    %vm226 = vmor %vm191, %vm209
    %vm227 = vmor %vm192, %vm210
    %vm228 = vmor %vm193, %vm211
    %vm229 = vmor %vm194, %vm212
    %vm230 = vmor %vm195, %vm213
    %vm231 = vmor %vm196, %vm214
    %vm232 = vmor %vm197, %vm215
    %vm233 = vmor %vm198, %vm216
    %vm234 = vmor %vm199, %vm217
    %vm235 = vmor %vm200, %vm218
    %vm236 = vmor %vm201, %vm219
    %vm237 = vmor %vm202, %vm220
    %vm238 = vmor %vm203, %vm221
    %vm239 = vmor %vm204, %vm222
    %vm240 = vmor %vm205, %vm223
    %v241 = vsel %vm224, 1, 0
    %v242 = vsel %vm225, 1, 0
    %v243 = vsel %vm226, 1, 0
    %v244 = vsel %vm227, 1, 0
    %v245 = vsel %vm228, 1, 0
    %v246 = vsel %vm229, 1, 0
    %v247 = vsel %vm230, 1, 0
    %v248 = vsel %vm231, 1, 0
    %v249 = vsel %vm232, 1, 0
    %v250 = vsel %vm233, 1, 0
    %v251 = vsel %vm234, 1, 0
    %v252 = vsel %vm235, 1, 0
    %v253 = vsel %vm236, 1, 0
    %v254 = vsel %vm237, 1, 0
    %v255 = vsel %vm238, 1, 0
    %v256 = vsel %vm239, 1, 0
    %v257 = vsel %vm240, 1, 0
    %v258 = vcvt.s32.f32 %v241
    %v259 = vcvt.s32.f32 %v242
    %v260 = vcvt.s32.f32 %v243
    %v261 = vcvt.s32.f32 %v244
    %v262 = vcvt.s32.f32 %v245
    %v263 = vcvt.s32.f32 %v246
    %v264 = vcvt.s32.f32 %v247
    %v265 = vcvt.s32.f32 %v248
    %v266 = vcvt.s32.f32 %v249
    %v267 = vcvt.s32.f32 %v250
    %v268 = vcvt.s32.f32 %v251
    %v269 = vcvt.s32.f32 %v252
    %v270 = vcvt.s32.f32 %v253
    %v271 = vcvt.s32.f32 %v254
    %v272 = vcvt.s32.f32 %v255
    %v273 = vcvt.s32.f32 %v256
    %v274 = vcvt.s32.f32 %v257
    %v275 = vpack.c.bf16 %v259, %v258
    %v276 = vpack.c.bf16 %v261, %v260
    %v277 = vpack.c.bf16 %v263, %v262
    %v278 = vpack.c.bf16 %v265, %v264
    %v279 = vpack.c.bf16 %v267, %v266
    %v280 = vpack.c.bf16 %v269, %v268
    %v281 = vpack.c.bf16 %v271, %v270
    %v282 = vpack.c.bf16 %v273, %v272
    %v283 = vpack.c.bf16 %v274, %v274
    %v284 = vld [vmem:[%s1] sm:$0xff]
    %v285 = vld [vmem:[%s1 + $0x8] sm:$0xff]
    %v286 = vld [vmem:[%s1 + $0x10] sm:$0xff]
    %v287 = vld [vmem:[%s1 + $0x18] sm:$0xff]
    %v288 = vld [vmem:[%s1 + $0x20] sm:$0xff]
    %v289 = vld [vmem:[%s1 + $0x28] sm:$0xff]
    %v290 = vld [vmem:[%s1 + $0x30] sm:$0xff]
    %v291 = vld [vmem:[%s1 + $0x38] sm:$0xff]
    %v292 = vld [vmem:[%s1 + $0x40] sm:$0xff]
    %v293 = vld [vmem:[%s1 + $0x48] sm:$0xff]
    %v294 = vld [vmem:[%s2] sm:$0xff]
    %v295 = vld [vmem:[%s2 + $0x8] sm:$0xff]
    %v296 = vld [vmem:[%s2 + $0x10] sm:$0xff]
    %v297 = vld [vmem:[%s2 + $0x18] sm:$0xff]
    %v298 = vld [vmem:[%s2 + $0x20] sm:$0xff]
    %v299 = vld [vmem:[%s2 + $0x28] sm:$0xff]
    %v300 = vld [vmem:[%s2 + $0x30] sm:$0xff]
    %v301 = vld [vmem:[%s2 + $0x38] sm:$0xff]
    %v302 = vld [vmem:[%s2 + $0x40] sm:$0xff]
    %v303 = vld [vmem:[%s2 + $0x48] sm:$0xff]
    %305 = vset.pattern.permute.xlu0 0
    %306 = vperm.xlu0 %305, %v294
    %v307 = vpop.permute.xlu0 %306
    %310 = vset.pattern.permute.xlu0 0
    %311 = vperm.xlu0 %310, %v295
    %v312 = vpop.permute.xlu0 %311
    %315 = vset.pattern.permute.xlu0 0
    %316 = vperm.xlu0 %315, %v296
    %v317 = vpop.permute.xlu0 %316
    %320 = vset.pattern.permute.xlu0 0
    %321 = vperm.xlu0 %320, %v297
    %v322 = vpop.permute.xlu0 %321
    %325 = vset.pattern.permute.xlu0 0
    %326 = vperm.xlu0 %325, %v298
    %v327 = vpop.permute.xlu0 %326
    %330 = vset.pattern.permute.xlu0 0
    %331 = vperm.xlu0 %330, %v299
    %v332 = vpop.permute.xlu0 %331
    %335 = vset.pattern.permute.xlu0 0
    %336 = vperm.xlu0 %335, %v300
    %v337 = vpop.permute.xlu0 %336
    %340 = vset.pattern.permute.xlu0 0
    %341 = vperm.xlu0 %340, %v301
    %v342 = vpop.permute.xlu0 %341
    %345 = vset.pattern.permute.xlu0 0
    %346 = vperm.xlu0 %345, %v302
    %v347 = vpop.permute.xlu0 %346
    %350 = vset.pattern.permute.xlu0 0
    %351 = vperm.xlu0 %350, %v303
    %v352 = vpop.permute.xlu0 %351
    %v364 = vunpack.c.l.b16 %v284
    %v365 = vunpack.c.h.b16 %v284
    %v366 = vunpack.c.l.b16 %v285
    %v367 = vunpack.c.h.b16 %v285
    %v368 = vunpack.c.l.b16 %v286
    %v369 = vunpack.c.h.b16 %v286
    %v370 = vunpack.c.l.b16 %v287
    %v371 = vunpack.c.h.b16 %v287
    %v372 = vunpack.c.l.b16 %v288
    %v373 = vunpack.c.h.b16 %v288
    %v374 = vunpack.c.l.b16 %v289
    %v375 = vunpack.c.h.b16 %v289
    %v376 = vunpack.c.l.b16 %v290
    %v377 = vunpack.c.h.b16 %v290
    %v378 = vunpack.c.l.b16 %v291
    %v379 = vunpack.c.h.b16 %v291
    %v380 = vunpack.c.l.b16 %v292
    %v381 = vunpack.c.h.b16 %v292
    %v382 = vunpack.c.l.b16 %v293
    %v383 = vunpack.c.h.b16 %v293
    %v384 = vpack.c.b16 %v366, %v364
    %v385 = vpack.c.b16 %v367, %v365
    %v386 = vpack.c.b16 %v370, %v368
    %v387 = vpack.c.b16 %v371, %v369
    %v388 = vpack.c.b16 %v374, %v372
    %v389 = vpack.c.b16 %v375, %v373
    %v390 = vpack.c.b16 %v378, %v376
    %v391 = vpack.c.b16 %v379, %v377
    %v392 = vpack.c.b16 %v382, %v380
    %v393 = vpack.c.b16 %v383, %v381
    %vm399 = vcmask 48128
    %v401 = vsel %vm399, %v385, 0
    %v404 = vsel %vm399, %v387, 0
    %v407 = vsel %vm399, %v389, 0
    %v410 = vsel %vm399, %v391, 0
    %v413 = vsel %vm399, %v393, 0
    %vm415 = vcmask 1042432
    %v417 = vsel %vm415, %v283, 0
    %419 = vmatpush.bf16.msra.mxu0 %v282
    %420 = vmatpush.bf16.msra.mxu0 %v281
    %421 = vmatpush.bf16.msra.mxu0 %v280
    %422 = vmatpush.bf16.msra.mxu0 %v279
    %423 = vmatpush.bf16.msra.mxu0 %v278
    %424 = vmatpush.bf16.msra.mxu0 %v277
    %425 = vmatpush.bf16.msra.mxu0 %v276
    %426 = vmatpush.bf16.msra.mxu0 %v275
    %427 = vmatmul.bf16.gmra.mxu0 %v384
    %v428 = vpop.f32.mrf.mxu0
    %v429 = vadd.f32 %v307, %v428
    %v430 = vpop.f32.mrf.mxu0
    %v431 = vadd.f32 %v312, %v430
    %432 = vmatmul.bf16.gmra.mxu0 %v386
    %v433 = vpop.f32.mrf.mxu0
    %v434 = vadd.f32 %v317, %v433
    %v435 = vpop.f32.mrf.mxu0
    %v436 = vadd.f32 %v322, %v435
    %437 = vmatmul.bf16.gmra.mxu0 %v388
    %v438 = vpop.f32.mrf.mxu0
    %v439 = vadd.f32 %v327, %v438
    %v440 = vpop.f32.mrf.mxu0
    %v441 = vadd.f32 %v332, %v440
    %442 = vmatmul.bf16.gmra.mxu0 %v390
    %v443 = vpop.f32.mrf.mxu0
    %v444 = vadd.f32 %v337, %v443
    %v445 = vpop.f32.mrf.mxu0
    %v446 = vadd.f32 %v342, %v445
    %447 = vmatmul.bf16.gmra.mxu0 %v392
    %v448 = vpop.f32.mrf.mxu0
    %v449 = vadd.f32 %v347, %v448
    %v450 = vpop.f32.mrf.mxu0
    %v451 = vadd.f32 %v352, %v450
    %452 = vdwg.mxu0
    %453 = vmatpush.bf16.msra.mxu0 0
    %454 = vmatpush.bf16.msra.mxu0 0
    %455 = vmatpush.bf16.msra.mxu0 0
    %456 = vmatpush.bf16.msra.mxu0 0
    %457 = vmatpush.bf16.msra.mxu0 0
    %458 = vmatpush.bf16.msra.mxu0 0
    %459 = vmatpush.bf16.msra.mxu0 0
    %460 = vmatpush.bf16.msra.mxu0 %v417
    %461 = vmatmul.bf16.gmra.mxu0 %v401
    %v462 = vpop.f32.mrf.mxu0
    %v463 = vadd.f32 %v429, %v462
    %v464 = vpop.f32.mrf.mxu0
    %v465 = vadd.f32 %v431, %v464
    %466 = vmatmul.bf16.gmra.mxu0 %v404
    %v467 = vpop.f32.mrf.mxu0
    %v468 = vadd.f32 %v434, %v467
    %v469 = vpop.f32.mrf.mxu0
    %v470 = vadd.f32 %v436, %v469
    %471 = vmatmul.bf16.gmra.mxu0 %v407
    %v472 = vpop.f32.mrf.mxu0
    %v473 = vadd.f32 %v439, %v472
    %v474 = vpop.f32.mrf.mxu0
    %v475 = vadd.f32 %v441, %v474
    %476 = vmatmul.bf16.gmra.mxu0 %v410
    %v477 = vpop.f32.mrf.mxu0
    %v478 = vadd.f32 %v444, %v477
    %v479 = vpop.f32.mrf.mxu0
    %v480 = vadd.f32 %v446, %v479
    %481 = vmatmul.bf16.gmra.mxu0 %v413
    %v482 = vpop.f32.mrf.mxu0
    %v483 = vadd.f32 %v449, %v482
    %v484 = vpop.f32.mrf.mxu0
    %v485 = vadd.f32 %v451, %v484
    %486 = vdwg.mxu0
    %v487 = vmax.f32 %v463, 0.0
    %v488 = vmax.f32 %v465, 0.0
    %v489 = vmax.f32 %v468, 0.0
    %v490 = vmax.f32 %v470, 0.0
    %v491 = vmax.f32 %v473, 0.0
    %v492 = vmax.f32 %v475, 0.0
    %v493 = vmax.f32 %v478, 0.0
    %v494 = vmax.f32 %v480, 0.0
    %v495 = vmax.f32 %v483, 0.0
    %v496 = vmax.f32 %v485, 0.0
    %v497 = vld [vmem:[%s3] sm:$0xf]
    %v498 = vld [vmem:[%s3 + $0x4] sm:$0xf]
    %v499 = vld [vmem:[%s3 + $0x8] sm:$0xf]
    %v500 = vld [vmem:[%s3 + $0xc] sm:$0xf]
    %v501 = vld [vmem:[%s3 + $0x10] sm:$0xf]
    %v502 = vld [vmem:[%s3 + $0x14] sm:$0xf]
    %v503 = vld [vmem:[%s3 + $0x18] sm:$0xf]
    %v504 = vld [vmem:[%s3 + $0x1c] sm:$0xf]
    %v505 = vld [vmem:[%s3 + $0x20] sm:$0xf]
    %v506 = vpack.c.bf16 %v488, %v487
    %v507 = vpack.c.bf16 %v490, %v489
    %v508 = vpack.c.bf16 %v492, %v491
    %v509 = vpack.c.bf16 %v494, %v493
    %v510 = vpack.c.bf16 %v496, %v495
    %v511 = vld [vmem:[%s4] sm:$0xff]
    %v512 = vld [vmem:[%s4 + $0x8] sm:$0xff]
    %v513 = vld [vmem:[%s4 + $0x10] sm:$0xff]
    %v514 = vld [vmem:[%s4 + $0x18] sm:$0xff]
    %v515 = vld [vmem:[%s4 + $0x20] sm:$0xff]
    %v516 = vld [vmem:[%s4 + $0x28] sm:$0xff]
    %v517 = vld [vmem:[%s4 + $0x30] sm:$0xff]
    %v518 = vld [vmem:[%s4 + $0x38] sm:$0xff]
    %v519 = vld [vmem:[%s4 + $0x40] sm:$0xff]
    %521 = vset.pattern.permute.xlu0 0
    %522 = vperm.xlu0 %521, %v511
    %v523 = vpop.permute.xlu0 %522
    %526 = vset.pattern.permute.xlu0 0
    %527 = vperm.xlu0 %526, %v512
    %v528 = vpop.permute.xlu0 %527
    %531 = vset.pattern.permute.xlu0 0
    %532 = vperm.xlu0 %531, %v513
    %v533 = vpop.permute.xlu0 %532
    %536 = vset.pattern.permute.xlu0 0
    %537 = vperm.xlu0 %536, %v514
    %v538 = vpop.permute.xlu0 %537
    %541 = vset.pattern.permute.xlu0 0
    %542 = vperm.xlu0 %541, %v515
    %v543 = vpop.permute.xlu0 %542
    %546 = vset.pattern.permute.xlu0 0
    %547 = vperm.xlu0 %546, %v516
    %v548 = vpop.permute.xlu0 %547
    %551 = vset.pattern.permute.xlu0 0
    %552 = vperm.xlu0 %551, %v517
    %v553 = vpop.permute.xlu0 %552
    %556 = vset.pattern.permute.xlu0 0
    %557 = vperm.xlu0 %556, %v518
    %v558 = vpop.permute.xlu0 %557
    %561 = vset.pattern.permute.xlu0 0
    %562 = vperm.xlu0 %561, %v519
    %v563 = vpop.permute.xlu0 %562
    %v574 = vunpack.c.l.b16 %v497
    %v575 = vunpack.c.l.b16 %v498
    %v576 = vunpack.c.l.b16 %v499
    %v577 = vunpack.c.l.b16 %v500
    %v578 = vunpack.c.l.b16 %v501
    %v579 = vunpack.c.l.b16 %v502
    %v580 = vunpack.c.l.b16 %v503
    %v581 = vunpack.c.l.b16 %v504
    %v582 = vunpack.c.l.b16 %v505
    %v583 = vpack.c.b16 %v575, %v574
    %v584 = vpack.c.b16 %v577, %v576
    %v585 = vpack.c.b16 %v579, %v578
    %v586 = vpack.c.b16 %v581, %v580
    %v587 = vpack.c.b16 %v582, %v582
    %vm588 = vcmask 654336
    %v590 = vsel %vm588, %v583, 0
    %v593 = vsel %vm588, %v584, 0
    %v596 = vsel %vm588, %v585, 0
    %v599 = vsel %vm588, %v586, 0
    %v602 = vsel %vm588, %v587, 0
    %604 = vmatpush.bf16.msra.mxu0 0
    %605 = vmatpush.bf16.msra.mxu0 0
    %606 = vmatpush.bf16.msra.mxu0 0
    %607 = vmatpush.bf16.msra.mxu0 %v510
    %608 = vmatpush.bf16.msra.mxu0 %v509
    %609 = vmatpush.bf16.msra.mxu0 %v508
    %610 = vmatpush.bf16.msra.mxu0 %v507
    %611 = vmatpush.bf16.msra.mxu0 %v506
    %612 = vmatmul.bf16.gmra.mxu0 %v590
    %v613 = vpop.f32.mrf.mxu0
    %v614 = vadd.f32 %v523, %v613
    %v615 = vpop.f32.mrf.mxu0
    %v616 = vadd.f32 %v528, %v615
    %617 = vmatmul.bf16.gmra.mxu0 %v593
    %v618 = vpop.f32.mrf.mxu0
    %v619 = vadd.f32 %v533, %v618
    %v620 = vpop.f32.mrf.mxu0
    %v621 = vadd.f32 %v538, %v620
    %622 = vmatmul.bf16.gmra.mxu0 %v596
    %v623 = vpop.f32.mrf.mxu0
    %v624 = vadd.f32 %v543, %v623
    %v625 = vpop.f32.mrf.mxu0
    %v626 = vadd.f32 %v548, %v625
    %627 = vmatmul.bf16.gmra.mxu0 %v599
    %v628 = vpop.f32.mrf.mxu0
    %v629 = vadd.f32 %v553, %v628
    %v630 = vpop.f32.mrf.mxu0
    %v631 = vadd.f32 %v558, %v630
    %632 = vmatmul.bf16.gmra.mxu0 %v602
    %v633 = vpop.f32.mrf.mxu0
    %v634 = vadd.f32 %v563, %v633
    %v635 = vpop.f32.mrf.mxu0
    %636 = vdwg.mxu0
    %v637 = vmax.f32 %v614, 0.0
    %v638 = vmax.f32 %v616, 0.0
    %v639 = vmax.f32 %v619, 0.0
    %v640 = vmax.f32 %v621, 0.0
    %v641 = vmax.f32 %v624, 0.0
    %v642 = vmax.f32 %v626, 0.0
    %v643 = vmax.f32 %v629, 0.0
    %v644 = vmax.f32 %v631, 0.0
    %v645 = vmax.f32 %v634, 0.0
    %v646 = vld [vmem:[%s5] sm:$0xff]
    %v647 = vld [vmem:[%s5 + $0x8] sm:$0xff]
    %v648 = vld [vmem:[%s5 + $0x10] sm:$0xff]
    %v649 = vld [vmem:[%s5 + $0x18] sm:$0xff]
    %v650 = vld [vmem:[%s5 + $0x20] sm:$0xff]
    %v651 = vld [vmem:[%s5 + $0x28] sm:$0xff]
    %v652 = vld [vmem:[%s5 + $0x30] sm:$0xff]
    %v653 = vld [vmem:[%s5 + $0x38] sm:$0xff]
    %v654 = vld [vmem:[%s5 + $0x40] sm:$0xff]
    %656 = vset.pattern.permute.xlu0 0
    %657 = vperm.xlu0 %656, %v646
    %v658 = vpop.permute.xlu0 %657
    %661 = vset.pattern.permute.xlu0 0
    %662 = vperm.xlu0 %661, %v647
    %v663 = vpop.permute.xlu0 %662
    %666 = vset.pattern.permute.xlu0 0
    %667 = vperm.xlu0 %666, %v648
    %v668 = vpop.permute.xlu0 %667
    %671 = vset.pattern.permute.xlu0 0
    %672 = vperm.xlu0 %671, %v649
    %v673 = vpop.permute.xlu0 %672
    %676 = vset.pattern.permute.xlu0 0
    %677 = vperm.xlu0 %676, %v650
    %v678 = vpop.permute.xlu0 %677
    %681 = vset.pattern.permute.xlu0 0
    %682 = vperm.xlu0 %681, %v651
    %v683 = vpop.permute.xlu0 %682
    %686 = vset.pattern.permute.xlu0 0
    %687 = vperm.xlu0 %686, %v652
    %v688 = vpop.permute.xlu0 %687
    %691 = vset.pattern.permute.xlu0 0
    %692 = vperm.xlu0 %691, %v653
    %v693 = vpop.permute.xlu0 %692
    %696 = vset.pattern.permute.xlu0 0
    %697 = vperm.xlu0 %696, %v654
    %v698 = vpop.permute.xlu0 %697
    %v700 = vmul.f32 %v658, %v637
    %v701 = vmul.f32 %v663, %v638
    %v702 = vmul.f32 %v668, %v639
    %v703 = vmul.f32 %v673, %v640
    %v704 = vmul.f32 %v678, %v641
    %v705 = vmul.f32 %v683, %v642
    %v706 = vmul.f32 %v688, %v643
    %v707 = vmul.f32 %v693, %v644
    %v708 = vmul.f32 %v698, %v645
    %vm709 = vcmask 64512
    %v710 = vsel %vm709, %v700, 0.0
    %v711 = vsel %vm709, %v701, 0.0
    %v712 = vadd.f32 %v710, %v711
    %v713 = vsel %vm709, %v702, 0.0
    %v714 = vadd.f32 %v712, %v713
    %v715 = vsel %vm709, %v703, 0.0
    %v716 = vadd.f32 %v714, %v715
    %v717 = vsel %vm709, %v704, 0.0
    %v718 = vadd.f32 %v716, %v717
    %v719 = vsel %vm709, %v705, 0.0
    %v720 = vadd.f32 %v718, %v719
    %v721 = vsel %vm709, %v706, 0.0
    %v722 = vadd.f32 %v720, %v721
    %v723 = vsel %vm709, %v707, 0.0
    %v724 = vadd.f32 %v722, %v723
    %v725 = vsel %vm709, %v708, 0.0
    %v726 = vadd.f32 %v724, %v725
    %v727 = vrot.slane %v726, 4
    %v728 = vadd.f32 %v726, %v727
    %v729 = vrot.slane %v728, 2
    %v730 = vadd.f32 %v728, %v729
    %v731 = vrot.slane %v730, 1
    %v732 = vadd.f32 %v730, %v731
    %s733 = sld [smem:[#allocation2]]
    %v734 = vstv %s733
    %v735 = vadd.f32 %v732, %v734
    %vm736 = vcmask 57344
    %737 = vst.msk [vmem:[#allocation3] sm:$0x1] %vm736, %v735
    // Predicated region
    $region30: #{recommender_forward.1} parent=1 // pred_check
      _
    $region31: #{recommender_forward.1} parent=1 // pred_check_branch
      %739 = sbr.rel (0) target = $region33
    $region32: #{recommender_forward.1} parent=1 // pred_region
      %741 = vsyncadd [#allocation4], 0
      %s743 = sshll.u32 [#allocation3], 4
      %s744 = int_to_ptr.vmem [resolvable:$true] %s743
      %s745 = sshll.u32 %s7, 4
      %s746 = int_to_ptr.hbm [resolvable:$true] %s745
      %748 = dma.vmem_to_hbm [thread:$0]  %s744, 16, %s746, [#allocation4]
    $region33: #{recommender_forward.1} parent=1 // pred_fallthru
      _
    // Predicated region
    $region34: #{recommender_forward.1} parent=1 // pred_check
      _
    $region35: #{recommender_forward.1} parent=1 // pred_check_branch
      %750 = sbr.rel (0) target = $region37
    $region36: #{recommender_forward.1} parent=1 // pred_region
      %752 = dma.done [#allocation4], 16
    $region37: #{recommender_forward.1} parent=1 // pred_fallthru
      _
    %753 = vsyncpa [#allocation4], 1

</llo_original>
